<compile_context>
chip_gen: v5e
topology: v5e:2x2
jax: 0.10.0
libtpu: 0.0.40
codegen_flags: <defaults>
</compile_context>

<pallas_src>
import functools

import jax
import jax.numpy as jnp
from jax import lax
from jax.experimental import pallas as pl
from jax.experimental.pallas import tpu as pltpu

_LANES = 128


def _num_tensorcores():
    """Best-effort TensorCores-per-chip (v7x has 2; v5e/v6e have 1)."""
    try:
        info = pltpu.get_tpu_info()
        for attr in ("num_cores", "num_tensorcores", "tensorcore_count",
                     "cores_per_chip"):
            n = getattr(info, attr, None)
            if isinstance(n, int) and 0 < n <= 8:
                return n
    except Exception:
        pass
    try:
        kind = jax.devices()[0].device_kind.lower()
        if "v7" in kind or "7x" in kind:
            return 2
    except Exception:
        pass
    return 1


def _pow_gamma(m, gamma):
    """(1 - pt) ** gamma, avoiding exp/log for the common integer gammas."""
    if gamma == 2.0:
        return m * m
    if float(gamma).is_integer() and gamma >= 0:
        return lax.integer_pow(m, int(gamma))
    return jnp.power(m, gamma)


def _focal_block(x, t, *, alpha, gamma, logits, hard_targets):
    """Elementwise focal loss on one strip/tile (f32 math)."""
    x = x.astype(jnp.float32)
    t = t.astype(jnp.float32)
    if logits and hard_targets:
        # Exact for t in {0,1}; 2 transcendentals/elem instead of 3.
        # (For |x| >~ 88 the log clamp at -100 differs slightly from the
        #  unclamped BCE-with-logits reference.)
        s = 1.0 / (1.0 + jnp.exp(-x))
        p_t = t * s + (1.0 - t) * (1.0 - s)
        bce = -jnp.maximum(jnp.log(p_t), -100.0)
        pt = p_t
    elif logits:
        # numerically-stable BCE-with-logits (== F.binary_cross_entropy_with_logits)
        bce = jnp.maximum(x, 0.0) - x * t + jnp.log1p(jnp.exp(-jnp.abs(x)))
        pt = jnp.exp(-bce)
    elif hard_targets:
        # Exact for t in {0,1}: select p_t directly -> 1 transcendental/elem.
        p_t = t * x + (1.0 - t) * (1.0 - x)
        bce = -jnp.maximum(jnp.log(p_t), -100.0)
        pt = p_t
    else:
        # F.binary_cross_entropy clamps each log term at -100.
        logp = jnp.maximum(jnp.log(x), -100.0)
        log1mp = jnp.maximum(jnp.log(1.0 - x), -100.0)
        bce = -(t * logp + (1.0 - t) * log1mp)
        pt = jnp.exp(-bce)
    return alpha * _pow_gamma(1.0 - pt, gamma) * bce


def _strip_accumulate(x_ref, t_ref, n_strips, block_kwargs):
    """Sum of focal loss over 8-row strips into an (8, lanes) f32 accumulator.

    Keeps live intermediates to a few vregs instead of block-sized arrays.
    """
    lanes = x_ref.shape[1]

    def body(i, acc):
        off = pl.multiple_of(i * 8, 8)
        xs = x_ref[pl.ds(off, 8), :]
        ts = t_ref[pl.ds(off, 8), :]
        return acc + _focal_block(xs, ts, **block_kwargs)

    init = jnp.zeros((8, lanes), jnp.float32)
    return lax.fori_loop(0, n_strips, body, init, unroll=min(8, n_strips))


def _focal_partial_sum_kernel(x_ref, t_ref, part_ref, *, inv_n, **block_kwargs):
    """Per-block (8, lanes) partial sum with the 1/N mean scale folded in."""
    n_strips = x_ref.shape[0] // 8
    acc = _strip_accumulate(x_ref, t_ref, n_strips, block_kwargs)
    part_ref[...] = acc * inv_n


def _focal_full_sum_kernel(x_ref, t_ref, out_ref, *, inv_n, **block_kwargs):
    """Single-block path: finish the whole mean in-kernel -> (1, 1) output."""
    n_strips = x_ref.shape[0] // 8
    acc = _strip_accumulate(x_ref, t_ref, n_strips, block_kwargs)
    row = jnp.sum(acc, axis=0, keepdims=True)                 # (1, lanes)
    out_ref[...] = jnp.sum(row, axis=1, keepdims=True) * inv_n  # (1, 1)


def _focal_elem_kernel(x_ref, t_ref, out_ref, **block_kwargs):
    """Elementwise map, processed in 8-row strips (bounded live intermediates)."""
    n_strips = x_ref.shape[0] // 8

    def body(i, carry):
        off = pl.multiple_of(i * 8, 8)
        f = _focal_block(x_ref[pl.ds(off, 8), :], t_ref[pl.ds(off, 8), :],
                         **block_kwargs)
        out_ref[pl.ds(off, 8), :] = f.astype(out_ref.dtype)
        return carry

    lax.fori_loop(0, n_strips, body, 0, unroll=min(8, n_strips))


def _round_up(x, m):
    return ((x + m - 1) // m) * m


def _pick_block_rows(rows, bytes_per_row, budget_bytes, min_blocks):
    """Largest multiple-of-8 divisor of `rows` that fits the VMEM budget and
    yields at least `min_blocks` grid steps (when `rows` allows it)."""
    cap = max(8, (budget_bytes // max(bytes_per_row, 1)) // 8 * 8)
    if min_blocks > 1:
        target = _round_up(max(1, -(-rows // min_blocks)), 8)
        cap = min(cap, target)
    if rows <= cap:
        return rows
    br = cap
    while br > 8 and rows % br != 0:
        br -= 8
    return br


def focal_loss(inputs, targets, *, alpha=1.0, gamma=2.0, logits=False,
               reduce=True, hard_targets=False, out_dtype=None,
               vmem_budget_bytes=12 << 20):
    """Pallas TPU implementation of FocalLoss.forward."""
    assert inputs.shape == targets.shape
    orig_shape = inputs.shape
    n_total = int(inputs.size)
    assert n_total > 0

    # Flatten to a lane-dense (rows, 128) slab.  If needed, pad with values
    # whose focal loss is exactly zero so reduce=True stays exact.
    chunk = 8 * _LANES
    padded = _round_up(n_total, chunk)
    xf = inputs.reshape(-1)
    tf = targets.reshape(-1)
    if padded != n_total:
        pad_x, pad_t = (100.0, 1.0) if logits else (1.0, 1.0)
        n_pad = padded - n_total
        xf = jnp.concatenate([xf, jnp.full((n_pad,), pad_x, inputs.dtype)])
        tf = jnp.concatenate([tf, jnp.full((n_pad,), pad_t, targets.dtype)])
    rows = padded // _LANES
    x2d = xf.reshape(rows, _LANES)
    t2d = tf.reshape(rows, _LANES)

    block_kwargs = dict(alpha=float(alpha), gamma=float(gamma),
                        logits=bool(logits), hard_targets=bool(hard_targets))

    # dtype-aware slab sizing: inputs stream in their native dtype, x2 buffers.
    in_bytes_per_row = _LANES * (x2d.dtype.itemsize + t2d.dtype.itemsize) * 2
    ntc = _num_tensorcores()
    min_blocks = 2 * ntc if ntc > 1 else 1

    def _params(block_io_bytes):
        # Explicit scoped-VMEM limit: IO slabs + headroom, capped at 48 MiB
        # (safe vs v7x's 64 MiB physical VMEM), floored at the 16 MiB default.
        limit = int(min(48 << 20, max(16 << 20, block_io_bytes + (8 << 20))))
        return pltpu.CompilerParams(dimension_semantics=("parallel",),
                                    vmem_limit_bytes=limit)

    if reduce:
        block_rows = _pick_block_rows(rows, in_bytes_per_row,
                                      vmem_budget_bytes, min_blocks)
        num_blocks = rows // block_rows
        inv_n = 1.0 / float(n_total)          # fold the mean scale into the kernel
        io_bytes = block_rows * in_bytes_per_row

        if num_blocks == 1:
            # Single block: finish the mean in-kernel, emit a (1, 1) scalar.
            kernel = functools.partial(_focal_full_sum_kernel, inv_n=inv_n,
                                       **block_kwargs)
            out = pl.pallas_call(
                kernel,
                out_shape=jax.ShapeDtypeStruct((1, 1), jnp.float32),
                grid_spec=pltpu.PrefetchScalarGridSpec(
                    num_scalar_prefetch=0,
                    grid=(1,),
                    in_specs=[pl.BlockSpec((rows, _LANES), lambda i: (0, 0)),
                              pl.BlockSpec((rows, _LANES), lambda i: (0, 0))],
                    out_specs=pl.BlockSpec((1, 1), lambda i: (0, 0))),
                compiler_params=_params(io_bytes),
            )(x2d, t2d)
            return out[0, 0]

        # Multi-block: lane-dense per-block partials on a parallel grid
        # (megacore-splittable on v7x); tiny finalize sum in the wrapper.
        kernel = functools.partial(_focal_partial_sum_kernel, inv_n=inv_n,
                                   **block_kwargs)
        partials = pl.pallas_call(
            kernel,
            out_shape=jax.ShapeDtypeStruct((num_blocks * 8, _LANES), jnp.float32),
            grid_spec=pltpu.PrefetchScalarGridSpec(
                num_scalar_prefetch=0,
                grid=(num_blocks,),
                in_specs=[pl.BlockSpec((block_rows, _LANES), lambda i: (i, 0)),
                          pl.BlockSpec((block_rows, _LANES), lambda i: (i, 0))],
                out_specs=pl.BlockSpec((8, _LANES), lambda i: (i, 0))),
            compiler_params=_params(io_bytes),
        )(x2d, t2d)
        return jnp.sum(partials)

    # ---- reduce=False: lane-dense elementwise map ---------------------------
    odt = jnp.dtype(out_dtype) if out_dtype is not None else jnp.dtype(jnp.float32)
    bytes_per_row = in_bytes_per_row + _LANES * odt.itemsize * 2
    block_rows = _pick_block_rows(rows, bytes_per_row, vmem_budget_bytes,
                                  min_blocks)
    num_blocks = rows // block_rows
    kernel = functools.partial(_focal_elem_kernel, **block_kwargs)
    out = pl.pallas_call(
        kernel,
        out_shape=jax.ShapeDtypeStruct((rows, _LANES), odt),
        grid_spec=pltpu.PrefetchScalarGridSpec(
            num_scalar_prefetch=0,
            grid=(num_blocks,),
            in_specs=[pl.BlockSpec((block_rows, _LANES), lambda i: (i, 0)),
                      pl.BlockSpec((block_rows, _LANES), lambda i: (i, 0))],
            out_specs=pl.BlockSpec((block_rows, _LANES), lambda i: (i, 0))),
        compiler_params=_params(block_rows * bytes_per_row),
    )(x2d, t2d)
    out = out.reshape(-1)
    if padded != n_total:
        out = out[:n_total]
    return out.reshape(orig_shape)


def _reference_focal_loss(inputs, targets, alpha=1.0, gamma=2.0, logits=False,
                          reduce=True):
    x = inputs.astype(jnp.float32)
    t = targets.astype(jnp.float32)
    if logits:
        bce = jnp.maximum(x, 0.0) - x * t + jnp.log1p(jnp.exp(-jnp.abs(x)))
    else:
        logp = jnp.maximum(jnp.log(x), -100.0)
        log1mp = jnp.maximum(jnp.log(1.0 - x), -100.0)
        bce = -(t * logp + (1.0 - t) * log1mp)
    pt = jnp.exp(-bce)
    f = alpha * (1.0 - pt) ** gamma * bce
    return jnp.mean(f) if reduce else f


if __name__ == "__main__":
    key = jax.random.PRNGKey(0)
    k1, k2 = jax.random.split(key)

    # NCHW: batch=2, channels=4, spatial=16x16
    B, C, H, W = 2, 4, 16, 16
    raw = jax.random.normal(k1, (B, C, H, W), dtype=jnp.float32)
    probs = jax.nn.sigmoid(raw)       # default FocalLoss (logits=False) expects probabilities
    targets = (jax.random.uniform(k2, (B, C, H, W)) > 0.5).astype(jnp.float32)

    # reduce=True (default): scalar mean
    loss = jax.block_until_ready(focal_loss(probs, targets))
    ref = _reference_focal_loss(probs, targets)
    assert jnp.allclose(loss, ref, rtol=1e-5, atol=1e-6), (loss, ref)

    # reduce=False: elementwise map (same shape as inputs)
    loss_map = jax.block_until_ready(focal_loss(probs, targets, reduce=False))
    ref_map = _reference_focal_loss(probs, targets, reduce=False)
    assert loss_map.shape == (B, C, H, W)
    assert jnp.allclose(loss_map, ref_map, rtol=1e-5, atol=1e-6)

    # logits=True path
    loss_lg = jax.block_until_ready(focal_loss(raw, targets, logits=True))
    ref_lg = _reference_focal_loss(raw, targets, logits=True)
    assert jnp.allclose(loss_lg, ref_lg, rtol=1e-5, atol=1e-6), (loss_lg, ref_lg)

    # hard-target fast paths (exact here since targets are {0,1})
    loss_hard = jax.block_until_ready(focal_loss(probs, targets, hard_targets=True))
    assert jnp.allclose(loss_hard, ref, rtol=1e-5, atol=1e-6), (loss_hard, ref)
    loss_lg_hard = jax.block_until_ready(
        focal_loss(raw, targets, logits=True, hard_targets=True))
    assert jnp.allclose(loss_lg_hard, ref_lg, rtol=1e-4, atol=1e-6), (loss_lg_hard, ref_lg)

    # bf16 inputs stream as bf16 (half the HBM bytes); math is still f32
    probs_bf16 = probs.astype(jnp.bfloat16)
    targets_bf16 = targets.astype(jnp.bfloat16)
    loss_bf16 = jax.block_until_ready(focal_loss(probs_bf16, targets_bf16))
    ref_bf16 = _reference_focal_loss(probs_bf16, targets_bf16)
    assert jnp.allclose(loss_bf16, ref_bf16, rtol=1e-4, atol=1e-6), (loss_bf16, ref_bf16)

    # size not divisible by 1024 exercises the exact-zero-loss padding path
    B2, C2, H2, W2 = 2, 4, 8, 8       # 512 elements
    raw_s = jax.random.normal(k1, (B2, C2, H2, W2), dtype=jnp.float32)
    probs_s = jax.nn.sigmoid(raw_s)
    targets_s = (jax.random.uniform(k2, (B2, C2, H2, W2)) > 0.5).astype(jnp.float32)
    loss_s = jax.block_until_ready(focal_loss(probs_s, targets_s))
    ref_s = _reference_focal_loss(probs_s, targets_s)
    assert jnp.allclose(loss_s, ref_s, rtol=1e-5, atol=1e-6), (loss_s, ref_s)
    loss_s_lg = jax.block_until_ready(focal_loss(raw_s, targets_s, logits=True))
    ref_s_lg = _reference_focal_loss(raw_s, targets_s, logits=True)
    assert jnp.allclose(loss_s_lg, ref_s_lg, rtol=1e-5, atol=1e-6), (loss_s_lg, ref_s_lg)
    map_s = jax.block_until_ready(focal_loss(probs_s, targets_s, reduce=False))
    assert map_s.shape == (B2, C2, H2, W2)
    assert jnp.allclose(map_s, _reference_focal_loss(probs_s, targets_s, reduce=False),
                        rtol=1e-5, atol=1e-6)

    # optional narrow-dtype map output (halves output HBM traffic)
    map_bf16 = jax.block_until_ready(
        focal_loss(probs, targets, reduce=False, out_dtype=jnp.bfloat16))
    assert map_bf16.dtype == jnp.bfloat16
    assert jnp.allclose(map_bf16.astype(jnp.float32), ref_map, rtol=3e-2, atol=1e-2)

    print("KERNEL_OK")
</pallas_src>

<mosaic_0001>
module attributes {stable_mosaic.version = 11 : i64} {
  func.func @_focal_full_sum_kernel(%arg0: i32, %arg1: memref<16x128xf32, #tpu.memory_space<vmem>>, %arg2: memref<16x128xf32, #tpu.memory_space<vmem>>, %arg3: memref<1x1xf32, #tpu.memory_space<vmem>>) attributes {dimension_semantics = [#tpu.dimension_semantics<parallel>], iteration_bounds = array<i64: 1>, scalar_prefetch = 0 : i64, scratch_operands = 0 : i64, tpu.core_type = #tpu.core_type<tc>, window_params = [{pipeline_mode = #tpu.pipeline_mode<synchronous>, transform_indices = @transform_0, window_bounds = array<i64: 16, 128>}, {pipeline_mode = #tpu.pipeline_mode<synchronous>, transform_indices = @transform_1, window_bounds = array<i64: 16, 128>}, {pipeline_mode = #tpu.pipeline_mode<synchronous>, transform_indices = @transform_2, window_bounds = array<i64: 1, 1>}]} {
    %cst = arith.constant 0.000000e+00 : f32
    %0 = vector.broadcast %cst : f32 to vector<8x128xf32>
    %c0_i32 = arith.constant 0 : i32
    %c8_i32 = arith.constant 8 : i32
    %1 = arith.muli %c0_i32, %c8_i32 : i32
    %2 = tpu.assume_multiple %1, 8 : i32
    %3 = arith.index_cast %2 : i32 to index
    %c0 = arith.constant 0 : index
    %4 = vector.load %arg1[%3, %c0] : memref<16x128xf32, #tpu.memory_space<vmem>>, vector<8x128xf32>
    %5 = arith.index_cast %2 : i32 to index
    %c0_0 = arith.constant 0 : index
    %6 = vector.load %arg2[%5, %c0_0] : memref<16x128xf32, #tpu.memory_space<vmem>>, vector<8x128xf32>
    %7 = math.log %4 : vector<8x128xf32>
    %cst_1 = arith.constant -1.000000e+02 : f32
    %8 = vector.broadcast %cst_1 : f32 to vector<8x128xf32>
    %9 = arith.maximumf %7, %8 : vector<8x128xf32>
    %cst_2 = arith.constant 1.000000e+00 : f32
    %10 = vector.broadcast %cst_2 : f32 to vector<8x128xf32>
    %11 = arith.subf %10, %4 : vector<8x128xf32>
    %12 = math.log %11 : vector<8x128xf32>
    %cst_3 = arith.constant -1.000000e+02 : f32
    %13 = vector.broadcast %cst_3 : f32 to vector<8x128xf32>
    %14 = arith.maximumf %12, %13 : vector<8x128xf32>
    %15 = arith.mulf %6, %9 : vector<8x128xf32>
    %cst_4 = arith.constant 1.000000e+00 : f32
    %16 = vector.broadcast %cst_4 : f32 to vector<8x128xf32>
    %17 = arith.subf %16, %6 : vector<8x128xf32>
    %18 = arith.mulf %17, %14 : vector<8x128xf32>
    %19 = arith.addf %15, %18 : vector<8x128xf32>
    %cst_5 = arith.constant 0.000000e+00 : f32
    %20 = vector.broadcast %cst_5 : f32 to vector<8x128xf32>
    %21 = arith.subf %20, %19 : vector<8x128xf32>
    %cst_6 = arith.constant 0.000000e+00 : f32
    %22 = vector.broadcast %cst_6 : f32 to vector<8x128xf32>
    %23 = arith.subf %22, %21 : vector<8x128xf32>
    %24 = math.exp %23 : vector<8x128xf32>
    %cst_7 = arith.constant 1.000000e+00 : f32
    %25 = vector.broadcast %cst_7 : f32 to vector<8x128xf32>
    %26 = arith.subf %25, %24 : vector<8x128xf32>
    %27 = arith.mulf %26, %26 : vector<8x128xf32>
    %cst_8 = arith.constant 1.000000e+00 : f32
    %28 = vector.broadcast %cst_8 : f32 to vector<8x128xf32>
    %29 = arith.mulf %28, %27 : vector<8x128xf32>
    %30 = arith.mulf %29, %21 : vector<8x128xf32>
    %31 = arith.addf %0, %30 : vector<8x128xf32>
    %c1_i32 = arith.constant 1 : i32
    %c8_i32_9 = arith.constant 8 : i32
    %32 = arith.muli %c1_i32, %c8_i32_9 : i32
    %33 = tpu.assume_multiple %32, 8 : i32
    %34 = arith.index_cast %33 : i32 to index
    %c0_10 = arith.constant 0 : index
    %35 = vector.load %arg1[%34, %c0_10] : memref<16x128xf32, #tpu.memory_space<vmem>>, vector<8x128xf32>
    %36 = arith.index_cast %33 : i32 to index
    %c0_11 = arith.constant 0 : index
    %37 = vector.load %arg2[%36, %c0_11] : memref<16x128xf32, #tpu.memory_space<vmem>>, vector<8x128xf32>
    %38 = math.log %35 : vector<8x128xf32>
    %cst_12 = arith.constant -1.000000e+02 : f32
    %39 = vector.broadcast %cst_12 : f32 to vector<8x128xf32>
    %40 = arith.maximumf %38, %39 : vector<8x128xf32>
    %cst_13 = arith.constant 1.000000e+00 : f32
    %41 = vector.broadcast %cst_13 : f32 to vector<8x128xf32>
    %42 = arith.subf %41, %35 : vector<8x128xf32>
    %43 = math.log %42 : vector<8x128xf32>
    %cst_14 = arith.constant -1.000000e+02 : f32
    %44 = vector.broadcast %cst_14 : f32 to vector<8x128xf32>
    %45 = arith.maximumf %43, %44 : vector<8x128xf32>
    %46 = arith.mulf %37, %40 : vector<8x128xf32>
    %cst_15 = arith.constant 1.000000e+00 : f32
    %47 = vector.broadcast %cst_15 : f32 to vector<8x128xf32>
    %48 = arith.subf %47, %37 : vector<8x128xf32>
    %49 = arith.mulf %48, %45 : vector<8x128xf32>
    %50 = arith.addf %46, %49 : vector<8x128xf32>
    %cst_16 = arith.constant 0.000000e+00 : f32
    %51 = vector.broadcast %cst_16 : f32 to vector<8x128xf32>
    %52 = arith.subf %51, %50 : vector<8x128xf32>
    %cst_17 = arith.constant 0.000000e+00 : f32
    %53 = vector.broadcast %cst_17 : f32 to vector<8x128xf32>
    %54 = arith.subf %53, %52 : vector<8x128xf32>
    %55 = math.exp %54 : vector<8x128xf32>
    %cst_18 = arith.constant 1.000000e+00 : f32
    %56 = vector.broadcast %cst_18 : f32 to vector<8x128xf32>
    %57 = arith.subf %56, %55 : vector<8x128xf32>
    %58 = arith.mulf %57, %57 : vector<8x128xf32>
    %cst_19 = arith.constant 1.000000e+00 : f32
    %59 = vector.broadcast %cst_19 : f32 to vector<8x128xf32>
    %60 = arith.mulf %59, %58 : vector<8x128xf32>
    %61 = arith.mulf %60, %52 : vector<8x128xf32>
    %62 = arith.addf %31, %61 : vector<8x128xf32>
    %c2_i32 = arith.constant 2 : i32
    %cst_20 = arith.constant dense<0.000000e+00> : vector<128xf32>
    %63 = vector.multi_reduction <add>, %62, %cst_20 [0] : vector<8x128xf32> to vector<128xf32>
    %64 = vector.shape_cast %63 : vector<128xf32> to vector<1x128xf32>
    %cst_21 = arith.constant dense<0.000000e+00> : vector<1xf32>
    %65 = vector.multi_reduction <add>, %64, %cst_21 [1] : vector<1x128xf32> to vector<1xf32>
    %66 = vector.shape_cast %65 : vector<1xf32> to vector<1x1xf32>
    %cst_22 = arith.constant 4.8828125E-4 : f32
    %67 = vector.broadcast %cst_22 : f32 to vector<1x1xf32>
    %68 = arith.mulf %66, %67 : vector<1x1xf32>
    %c0_23 = arith.constant 0 : index
    %c0_24 = arith.constant 0 : index
    %69 = vector.load %arg3[%c0_23, %c0_24] : memref<1x1xf32, #tpu.memory_space<vmem>>, vector<1x1xf32>
    tpu.vector_store %arg3[%c0_23, %c0_24], %68 {strides = array<i32>} : memref<1x1xf32, #tpu.memory_space<vmem>>, vector<1x1xf32>,
    return
  }
  func.func @transform_0(%arg0: i32) -> (i32, i32) {
    %c0_i32 = arith.constant 0 : i32
    %c0_i32_0 = arith.constant 0 : i32
    %c0_i32_1 = arith.constant 0 : i32
    return %c0_i32, %c0_i32_0 : i32, i32
  }
  func.func @transform_1(%arg0: i32) -> (i32, i32) {
    %c0_i32 = arith.constant 0 : i32
    %c0_i32_0 = arith.constant 0 : i32
    %c0_i32_1 = arith.constant 0 : i32
    return %c0_i32, %c0_i32_0 : i32, i32
  }
  func.func @transform_2(%arg0: i32) -> (i32, i32) {
    %c0_i32 = arith.constant 0 : i32
    %c0_i32_0 = arith.constant 0 : i32
    %c0_i32_1 = arith.constant 0 : i32
    return %c0_i32, %c0_i32_0 : i32, i32
  }
}

</mosaic_0001>

<llo_original>
// kernel: tpu_custom_call.1
$region0: #{tpu_custom_call.1}
  #allocation0 [shape = 'u32[]', space=smem, size = 0x4, offset = 0x4, fixed_abs, tag = 'smem constant byte address 0x4 - core index']
  #allocation1 [shape = 'u32[72,128]{1,0:T(1,128)}', space=vmem, size = 0x9000, scoped, tag = 'internal scratch']
  %s0 = inlined_call_operand.hbm [shape: f32[16,128], index: 0, kind: input, shape index: {}]
  %s1 = inlined_call_operand.hbm [shape: f32[16,128], index: 1, kind: input, shape index: {}]
  %s2 = inlined_call_operand.hbm [shape: f32[1,1], index: 2, kind: output, shape index: {}]
  %s3 = sld [smem:[#allocation0]]
  $region26: #{tpu_custom_call.1} parent=0
    _
  %s5 = ssub.s32 1, %s3
  %s6 = scalar_select 0, %s5, %s3
  $region1: #{tpu_custom_call.1} parent=0
    #allocation2 [shape = 'u8[8192]{0}', space=vmem, size = 0x2000, scoped, tag = 'input window, operand 0, single buffered']
    #allocation3 [shape = 's32[1]{0}', space=sflag, size = 0x4, scoped, tag = 'scoped memory for tpu_custom_call.1']
    #allocation4 [shape = 's32[1]{0}', space=sflag, size = 0x4, scoped, tag = 'scoped memory for tpu_custom_call.1']
    #allocation5 [shape = 'u8[8192]{0}', space=vmem, size = 0x2000, scoped, tag = 'input window, operand 1, single buffered']
    #allocation6 [shape = 's32[1]{0}', space=sflag, size = 0x4, scoped, tag = 'scoped memory for tpu_custom_call.1']
    #allocation7 [shape = 'u8[512]{0}', space=vmem, size = 0x400, scoped, tag = 'output window, operand 0, single buffered']
    %7 = vsyncpa [#allocation3], 0
    %8 = vsyncpa [#allocation6], 0
    %9 = vsyncpa [#allocation4], 0
    // Predicated region
    $region2: #{tpu_custom_call.1} parent=1 // pred_check
      _
    $region3: #{tpu_custom_call.1} parent=1 // pred_check_branch
      %11 = sbr.rel (0) target = $region5
    $region4: #{tpu_custom_call.1} parent=1 // pred_region
      %13 = vsyncadd [#allocation3], 0
      %s14 = sshll.u32 %s0, 4
      %s15 = int_to_ptr.hbm [resolvable:$true] %s14
      %s16 = sshll.u32 [#allocation2], 4
      %s17 = int_to_ptr.vmem [resolvable:$true] %s16
      %22 = dma.hbm_to_vmem [thread:$0]  %s15, 256, %s17, [#allocation3], 128, 128, 8
    $region5: #{tpu_custom_call.1} parent=1 // pred_fallthru
      _
    // Predicated region
    $region6: #{tpu_custom_call.1} parent=1 // pred_check
      _
    $region7: #{tpu_custom_call.1} parent=1 // pred_check_branch
      %24 = sbr.rel (0) target = $region9
    $region8: #{tpu_custom_call.1} parent=1 // pred_region
      %26 = vsyncadd [#allocation6], 0
      %s27 = sshll.u32 %s1, 4
      %s28 = int_to_ptr.hbm [resolvable:$true] %s27
      %s29 = sshll.u32 [#allocation5], 4
      %s30 = int_to_ptr.vmem [resolvable:$true] %s29
      %35 = dma.hbm_to_vmem [thread:$0]  %s28, 256, %s30, [#allocation6], 128, 128, 8
    $region9: #{tpu_custom_call.1} parent=1 // pred_fallthru
      _
    // Predicated region
    $region10: #{tpu_custom_call.1} parent=1 // pred_check
      _
    $region11: #{tpu_custom_call.1} parent=1 // pred_check_branch
      %37 = sbr.rel (0) target = $region13
    $region12: #{tpu_custom_call.1} parent=1 // pred_region
      %39 = dma.done [#allocation3], 256
    $region13: #{tpu_custom_call.1} parent=1 // pred_fallthru
      _
    // Predicated region
    $region14: #{tpu_custom_call.1} parent=1 // pred_check
      _
    $region15: #{tpu_custom_call.1} parent=1 // pred_check_branch
      %41 = sbr.rel (0) target = $region17
    $region16: #{tpu_custom_call.1} parent=1 // pred_region
      %43 = dma.done [#allocation6], 256
    $region17: #{tpu_custom_call.1} parent=1 // pred_fallthru
      _
    %v44 = vld [vmem:[#allocation2] sm:$0xff]
    %v45 = vld [vmem:[#allocation5] sm:$0xff]
    %v46 = vlog2.pop %v44
    %v47 = vmul.f32 %v46, 0.6931472
    %v48 = vmax.f32 %v47, -100.0
    %v49 = vsub.f32 1.0, %v44
    %v50 = vlog2.pop %v49
    %v51 = vmul.f32 %v50, 0.6931472
    %v52 = vmax.f32 %v51, -100.0
    %v53 = vmul.f32 %v45, %v48
    %v54 = vsub.f32 1.0, %v45
    %v55 = vmul.f32 %v54, %v52
    %v56 = vadd.f32 %v53, %v55
    %v57 = vsub.f32 0.0, %v56
    %v58 = vsub.f32 0.0, %v57
    %v59 = vmul.f32 %v58, 1.442695
    %v60 = vpow.pop %v59
    %v61 = vsub.f32 1.0, %v60
    %v62 = vmul.f32 %v61, %v61
    %v63 = vmul.f32 %v62, %v57
    %v64 = vadd.f32 %v63, 0.0
    %s65 = scalar_lea.vmem [#allocation2], 8
    %v66 = vld [vmem:[%s65] sm:$0xff]
    %s67 = scalar_lea.vmem [#allocation5], 8
    %v68 = vld [vmem:[%s67] sm:$0xff]
    %v69 = vlog2.pop %v66
    %v70 = vmul.f32 %v69, 0.6931472
    %v71 = vmax.f32 %v70, -100.0
    %v72 = vsub.f32 1.0, %v66
    %v73 = vlog2.pop %v72
    %v74 = vmul.f32 %v73, 0.6931472
    %v75 = vmax.f32 %v74, -100.0
    %v76 = vmul.f32 %v68, %v71
    %v77 = vsub.f32 1.0, %v68
    %v78 = vmul.f32 %v77, %v75
    %v79 = vadd.f32 %v76, %v78
    %v80 = vsub.f32 0.0, %v79
    %v81 = vsub.f32 0.0, %v80
    %v82 = vmul.f32 %v81, 1.442695
    %v83 = vpow.pop %v82
    %v84 = vsub.f32 1.0, %v83
    %v85 = vmul.f32 %v84, %v84
    %v86 = vmul.f32 %v85, %v80
    %v87 = vadd.f32 %v64, %v86
    %v88 = vrot.slane %v87, 4
    %v89 = vadd.f32 %v87, %v88
    %v90 = vrot.slane %v89, 2
    %v91 = vadd.f32 %v89, %v90
    %v92 = vrot.slane %v91, 1
    %v93 = vadd.f32 %v91, %v92
    %94 = vadd.xlane.f32.xlu0 %v93
    %v95 = vpop.xlane.xlu0 %94
    %v96 = vmul.f32 %v95, 0.00048828125
    %vm97 = vcmask 0
    %98 = vst.msk [vmem:[#allocation7] sm:$0x1] %vm97, %v96
    // Predicated region
    $region18: #{tpu_custom_call.1} parent=1 // pred_check
      _
    $region19: #{tpu_custom_call.1} parent=1 // pred_check_branch
      %100 = sbr.rel (0) target = $region21
    $region20: #{tpu_custom_call.1} parent=1 // pred_region
      %102 = vsyncadd [#allocation4], 0
      %s104 = sshll.u32 [#allocation7], 4
      %s105 = int_to_ptr.vmem [resolvable:$true] %s104
      %s106 = sshll.u32 %s2, 4
      %s107 = int_to_ptr.hbm [resolvable:$true] %s106
      %109 = dma.vmem_to_hbm [thread:$0]  %s105, 16, %s107, [#allocation4]
    $region21: #{tpu_custom_call.1} parent=1 // pred_fallthru
      _
    // Predicated region
    $region22: #{tpu_custom_call.1} parent=1 // pred_check
      _
    $region23: #{tpu_custom_call.1} parent=1 // pred_check_branch
      %111 = sbr.rel (0) target = $region25
    $region24: #{tpu_custom_call.1} parent=1 // pred_region
      %113 = dma.done [#allocation4], 16
    $region25: #{tpu_custom_call.1} parent=1 // pred_fallthru
      _
    %114 = vsyncpa [#allocation3], 1
    %115 = vsyncpa [#allocation6], 1
    %116 = vsyncpa [#allocation4], 1

</llo_original>
